<compile_context>
chip_gen: v7x
topology: tpu7x:2x2x1
jax: 0.10.0
libtpu: 0.0.40
codegen_flags: <defaults>
</compile_context>

<pallas_src>
import functools

import jax
import jax.numpy as jnp
from jax.experimental import pallas as pl
from jax.experimental.pallas import tpu as pltpu


def _round_up(x, m):
    return (x + m - 1) // m * m


def _vmem_capacity_bytes():
    """Physical VMEM per TensorCore; conservative (v7x-sized) fallback."""
    try:
        info = pltpu.get_tpu_info()
        cap = int(getattr(info, "vmem_capacity_bytes", 0) or 0)
        if cap > 0:
            return cap
    except Exception:
        pass
    return 64 << 20


def _ffn_kernel_acc_out(x_ref, w1_ref, b1_ref, w2_ref, b2_ref, o_ref):
    """fp32-output path: accumulate the d_ff reduction directly into o_ref.

    Grid = (row tiles [parallel], d_ff chunks [arbitrary/reduction]).
    """
    j = pl.program_id(1)

    @pl.when(j == 0)
    def _init():
        # Fold b2 into the accumulator init (saves a full VPU pass at finalize).
        o_ref[...] = jnp.broadcast_to(b2_ref[...].astype(o_ref.dtype), o_ref.shape)

    # First matmul on the current (d_model, tf) slice of W1; bias + ReLU on the
    # fp32 result; downcast fused with the ReLU so the (tm, tf) temp that
    # Mosaic materializes between the two matmuls is in the weight dtype.
    h = jnp.dot(x_ref[...], w1_ref[...], preferred_element_type=jnp.float32)
    h = jnp.maximum(h + b1_ref[...], 0.0).astype(w2_ref.dtype)
    # (dropout == identity in eval mode)

    # Accumulate partial products of the second matmul over d_ff chunks.
    o_ref[...] += jnp.dot(h, w2_ref[...], preferred_element_type=jnp.float32)


def _ffn_kernel_acc_scratch(x_ref, w1_ref, b1_ref, w2_ref, b2_ref, o_ref, acc_ref):
    """Low-precision-output path: fp32 VMEM accumulator, downcast once at the end."""
    j = pl.program_id(1)

    @pl.when(j == 0)
    def _init():
        acc_ref[...] = jnp.broadcast_to(
            b2_ref[...].astype(jnp.float32), acc_ref.shape)

    h = jnp.dot(x_ref[...], w1_ref[...], preferred_element_type=jnp.float32)
    h = jnp.maximum(h + b1_ref[...], 0.0).astype(w2_ref.dtype)
    acc_ref[...] += jnp.dot(h, w2_ref[...], preferred_element_type=jnp.float32)

    @pl.when(j == pl.num_programs(1) - 1)
    def _finalize():
        o_ref[...] = acc_ref[...].astype(o_ref.dtype)


@functools.partial(jax.jit, static_argnames=("tm", "tf"))
def positionwise_feed_forward(x, w1, b1, w2, b2, *, tm=None, tf=None):
    """x: (batch, seq, d_model); w1: (d_model, d_ff); w2: (d_ff, d_model)."""
    batch, seq, d_model = x.shape
    d_ff = w1.shape[1]
    n = batch * seq

    x_isz = jnp.dtype(x.dtype).itemsize
    w_isz = jnp.dtype(w1.dtype).itemsize
    fp32_out = jnp.dtype(x.dtype) == jnp.dtype(jnp.float32)
    use_scratch = not fp32_out

    # ---- static tile selection -------------------------------------------------
    gran = 16                                  # row granularity (covers bf16 packing)
    d_model_p = _round_up(d_model, 128)        # lane-dense feature dims

    # d_ff chunk: 1024 for transformer-sized d_ff, else the full (128-rounded) width.
    if tf is None:
        tf = 1024 if d_ff >= 1024 else d_ff
    tf_eff = max(128, min(_round_up(tf, 128), _round_up(d_ff, 128)))

    # Row tile: large enough to amortize W1/W2 streaming (re-fetched once per
    # row tile); bf16 activations are half the bytes, so go 2x larger.
    if tm is None:
        tm = 2048 if x_isz <= 2 else 1024
    tm_eff = max(gran, min(_round_up(tm, gran), _round_up(n, gran)))

    # Generation-aware VMEM ceiling (64 MiB/TC on v7x, 128 MiB on v5e/v6e).
    vmem_cap = _vmem_capacity_bytes()
    budget = min(vmem_cap - (8 << 20), int(vmem_cap * 0.9))

    def vmem_need(tm_, tf_):
        return (
            2 * tm_ * d_model_p * x_isz                      # x tile (double-buffered)
            + 2 * tm_ * d_model_p * x_isz                    # out tile (double-buffered)
            + 2 * (d_model_p + 1) * tf_ * w_isz              # W1 + b1 slices
            + 2 * (tf_ + 1) * d_model_p * w_isz              # W2 slice + b2
            + tm_ * tf_ * 4                                  # fp32 h intermediate
            + (tm_ * tf_ * w_isz if w_isz < 4 else 0)        # downcast copy of h
            + (tm_ * d_model_p * 4 if use_scratch else 0)    # fp32 accumulator scratch
        )

    # Shrink row tile first, then the d_ff chunk, until the working set fits.
    while vmem_need(tm_eff, tf_eff) > budget and tm_eff > 4 * gran:
        tm_eff = max(gran, _round_up(tm_eff // 2, gran))
    while vmem_need(tm_eff, tf_eff) > budget and tf_eff > 256:
        tf_eff = max(128, _round_up(tf_eff // 2, 128))

    # Keep >= 2 row tiles so the "parallel" axis can shard across v7x's two
    # TensorCores (harmless on single-TC chips).
    if _round_up(n, tm_eff) // tm_eff < 2 and tm_eff > gran:
        tm_eff = max(gran, _round_up(tm_eff // 2, gran))

    n_pad = _round_up(n, tm_eff)
    d_ff_p = _round_up(d_ff, tf_eff)

    # ---- zero-pad operands only when needed (pads are exact: relu(0)=0 and zero
    # rows/cols of W contribute nothing). Typical transformer dims need no feature
    # pad; for odd model dims, pre-pad the weights once at init instead of per call.
    x2d = x.reshape(n, d_model)
    if n_pad != n or d_model_p != d_model:
        x2d = jnp.pad(x2d, ((0, n_pad - n), (0, d_model_p - d_model)))
    if w1.shape != (d_model_p, d_ff_p):
        w1 = jnp.pad(w1, ((0, d_model_p - d_model), (0, d_ff_p - d_ff)))
    if b1.shape != (d_ff_p,):
        b1 = jnp.pad(b1, (0, d_ff_p - d_ff))
    if w2.shape != (d_ff_p, d_model_p):
        w2 = jnp.pad(w2, ((0, d_ff_p - d_ff), (0, d_model_p - d_model)))
    if b2.shape != (d_model_p,):
        b2 = jnp.pad(b2, (0, d_model_p - d_model))
    b1 = b1.reshape(1, d_ff_p)
    b2 = b2.reshape(1, d_model_p)

    need = vmem_need(tm_eff, tf_eff)
    vmem_limit = min(max(int(need * 1.25) + (2 << 20), 32 << 20), budget)

    grid = (n_pad // tm_eff, d_ff_p // tf_eff)

    # Advisory cost estimate: 2 matmuls, weights re-streamed once per row tile.
    flops = 4 * n_pad * d_model_p * d_ff_p
    bytes_accessed = (
        2 * n_pad * d_model_p * x_isz
        + grid[0] * 2 * d_model_p * d_ff_p * w_isz
    )

    kernel = _ffn_kernel_acc_out if fp32_out else _ffn_kernel_acc_scratch
    scratch = [] if fp32_out else [pltpu.VMEM((tm_eff, d_model_p), jnp.float32)]

    out2d = pl.pallas_call(
        kernel,
        out_shape=jax.ShapeDtypeStruct((n_pad, d_model_p), x.dtype),
        grid_spec=pltpu.PrefetchScalarGridSpec(
            num_scalar_prefetch=0,
            grid=grid,
            in_specs=[
                pl.BlockSpec((tm_eff, d_model_p), lambda i, j: (i, 0)),   # x rows
                # NOTE: if weight DMA is still exposed in xprof after the large
                # row tile, deepen prefetch on the two W specs below with
                # pipeline_mode=pl.Buffered(3) (left at default 2 here).
                pl.BlockSpec((d_model_p, tf_eff), lambda i, j: (0, j)),   # W1 slice
                pl.BlockSpec((1, tf_eff), lambda i, j: (0, j)),           # b1 slice
                pl.BlockSpec((tf_eff, d_model_p), lambda i, j: (j, 0)),   # W2 slice
                pl.BlockSpec((1, d_model_p), lambda i, j: (0, 0)),        # b2
            ],
            out_specs=pl.BlockSpec((tm_eff, d_model_p), lambda i, j: (i, 0)),
            scratch_shapes=scratch,
        ),
        compiler_params=pltpu.CompilerParams(
            dimension_semantics=("parallel", "arbitrary"),
            vmem_limit_bytes=vmem_limit,
        ),
        cost_estimate=pl.CostEstimate(
            flops=flops, transcendentals=0, bytes_accessed=bytes_accessed),
    )(x2d, w1, b1, w2, b2)

    if n_pad != n or d_model_p != d_model:
        out2d = out2d[:n, :d_model]
    return out2d.reshape(batch, seq, d_model)


def _init_linear(key, in_features, out_features, dtype=jnp.float32):
    """Deterministic init mimicking torch.nn.Linear (U[-1/sqrt(in), 1/sqrt(in)]).

    Returns weight already transposed to (in_features, out_features).
    """
    kw, kb = jax.random.split(key)
    bound = 1.0 / (in_features ** 0.5)
    w = jax.random.uniform(kw, (in_features, out_features), dtype, -bound, bound)
    b = jax.random.uniform(kb, (out_features,), dtype, -bound, bound)
    return w, b


if __name__ == "__main__":
    # Small but lane-dense demo shapes (feature dims are multiples of 128, so the
    # wrapper emits no pad ops).
    d_model, d_ff = 128, 256
    batch, seq = 2, 8

    key = jax.random.PRNGKey(0)
    k_x, k_l1, k_l2 = jax.random.split(key, 3)

    x = jax.random.normal(k_x, (batch, seq, d_model), jnp.float32)
    w1, b1 = _init_linear(k_l1, d_model, d_ff)
    w2, b2 = _init_linear(k_l2, d_ff, d_model)

    # fp32 path (accumulates directly into the output block), tight reference check.
    out = positionwise_feed_forward(x, w1, b1, w2, b2)
    out = jax.block_until_ready(out)
    ref = jnp.maximum(x @ w1 + b1, 0.0) @ w2 + b2
    assert out.shape == (batch, seq, d_model)
    assert jnp.allclose(out, ref, atol=1e-5, rtol=1e-5), "fp32 mismatch vs reference"

    # bf16 weights/activations (fast MXU path on v6e/v7x), fp32 accumulation in
    # a VMEM scratch, single downcast at finalize.
    xb, w1b, b1b, w2b, b2b = (a.astype(jnp.bfloat16) for a in (x, w1, b1, w2, b2))
    out_bf16 = jax.block_until_ready(
        positionwise_feed_forward(xb, w1b, b1b, w2b, b2b))
    ref_bf16 = (jnp.maximum(xb.astype(jnp.float32) @ w1b.astype(jnp.float32)
                            + b1b.astype(jnp.float32), 0.0)
                @ w2b.astype(jnp.float32) + b2b.astype(jnp.float32))
    assert out_bf16.dtype == jnp.bfloat16
    assert jnp.allclose(out_bf16.astype(jnp.float32), ref_bf16,
                        atol=1e-1, rtol=5e-2), "bf16 mismatch vs reference"

    print("KERNEL_OK")
</pallas_src>

<mosaic_0001>
module attributes {stable_mosaic.version = 11 : i64} {
  func.func @_ffn_kernel_acc_out(%arg0: i32, %arg1: i32, %arg2: memref<16x128xf32, #tpu.memory_space<vmem>>, %arg3: memref<128x256xf32, #tpu.memory_space<vmem>>, %arg4: memref<1x256xf32, #tpu.memory_space<vmem>>, %arg5: memref<256x128xf32, #tpu.memory_space<vmem>>, %arg6: memref<1x128xf32, #tpu.memory_space<vmem>>, %arg7: memref<16x128xf32, #tpu.memory_space<vmem>>) attributes {dimension_semantics = [#tpu.dimension_semantics<parallel>, #tpu.dimension_semantics<arbitrary>], iteration_bounds = array<i64: 1, 1>, scalar_prefetch = 0 : i64, scratch_operands = 0 : i64, tpu.core_type = #tpu.core_type<tc>, window_params = [{transform_indices = @transform_0, window_bounds = array<i64: 16, 128>}, {transform_indices = @transform_1, window_bounds = array<i64: 128, 256>}, {transform_indices = @transform_2, window_bounds = array<i64: 1, 256>}, {transform_indices = @transform_3, window_bounds = array<i64: 256, 128>}, {pipeline_mode = #tpu.pipeline_mode<synchronous>, transform_indices = @transform_4, window_bounds = array<i64: 1, 128>}, {transform_indices = @transform_5, window_bounds = array<i64: 16, 128>}]} {
    %c0_i32 = arith.constant 0 : i32
    %0 = arith.cmpi eq, %arg1, %c0_i32 : i32
    %1 = arith.extui %0 : i1 to i32
    %c0_i32_0 = arith.constant 0 : i32
    %2 = arith.cmpi ne, %1, %c0_i32_0 : i32
    scf.if %2 {
      %c0_14 = arith.constant 0 : index
      %c0_15 = arith.constant 0 : index
      %16 = vector.load %arg6[%c0_14, %c0_15] : memref<1x128xf32, #tpu.memory_space<vmem>>, vector<1x128xf32>
      %17 = vector.shape_cast %16 : vector<1x128xf32> to vector<1x128xf32>
      %18 = vector.broadcast %17 : vector<1x128xf32> to vector<16x128xf32>
      %c0_16 = arith.constant 0 : index
      %c0_17 = arith.constant 0 : index
      %19 = vector.load %arg7[%c0_16, %c0_17] : memref<16x128xf32, #tpu.memory_space<vmem>>, vector<16x128xf32>
      tpu.vector_store %arg7[%c0_16, %c0_17], %18 {strides = array<i32>} : memref<16x128xf32, #tpu.memory_space<vmem>>, vector<16x128xf32>,
    } else {
    }
    %c0 = arith.constant 0 : index
    %c0_1 = arith.constant 0 : index
    %3 = vector.load %arg2[%c0, %c0_1] : memref<16x128xf32, #tpu.memory_space<vmem>>, vector<16x128xf32>
    %c0_2 = arith.constant 0 : index
    %c0_3 = arith.constant 0 : index
    %4 = vector.load %arg3[%c0_2, %c0_3] : memref<128x256xf32, #tpu.memory_space<vmem>>, vector<128x256xf32>
    %cst = arith.constant dense<0.000000e+00> : vector<16x256xf32>
    %5 = tpu.matmul %3, %4, %cst {dimension_numbers = #tpu.dot_dimension_numbers<[1], [0], [0], [1], [0, 0, 1, 1], [], []>} : vector<16x128xf32>, vector<128x256xf32>, vector<16x256xf32> -> vector<16x256xf32>
    %c0_4 = arith.constant 0 : index
    %c0_5 = arith.constant 0 : index
    %6 = vector.load %arg4[%c0_4, %c0_5] : memref<1x256xf32, #tpu.memory_space<vmem>>, vector<1x256xf32>
    %7 = vector.broadcast %6 : vector<1x256xf32> to vector<16x256xf32>
    %8 = arith.addf %5, %7 : vector<16x256xf32>
    %cst_6 = arith.constant 0.000000e+00 : f32
    %9 = vector.broadcast %cst_6 : f32 to vector<16x256xf32>
    %10 = arith.maximumf %8, %9 : vector<16x256xf32>
    %c0_7 = arith.constant 0 : index
    %c0_8 = arith.constant 0 : index
    %11 = vector.load %arg7[%c0_7, %c0_8] : memref<16x128xf32, #tpu.memory_space<vmem>>, vector<16x128xf32>
    %c0_9 = arith.constant 0 : index
    %c0_10 = arith.constant 0 : index
    %12 = vector.load %arg5[%c0_9, %c0_10] : memref<256x128xf32, #tpu.memory_space<vmem>>, vector<256x128xf32>
    %cst_11 = arith.constant dense<0.000000e+00> : vector<16x128xf32>
    %13 = tpu.matmul %10, %12, %cst_11 {dimension_numbers = #tpu.dot_dimension_numbers<[1], [0], [0], [1], [0, 0, 1, 1], [], []>} : vector<16x256xf32>, vector<256x128xf32>, vector<16x128xf32> -> vector<16x128xf32>
    %14 = arith.addf %11, %13 : vector<16x128xf32>
    %c0_12 = arith.constant 0 : index
    %c0_13 = arith.constant 0 : index
    %15 = vector.load %arg7[%c0_12, %c0_13] : memref<16x128xf32, #tpu.memory_space<vmem>>, vector<16x128xf32>
    tpu.vector_store %arg7[%c0_12, %c0_13], %14 {strides = array<i32>} : memref<16x128xf32, #tpu.memory_space<vmem>>, vector<16x128xf32>,
    return
  }
  func.func @transform_0(%arg0: i32, %arg1: i32) -> (i32, i32) {
    %c0_i32 = arith.constant 0 : i32
    %c0_i32_0 = arith.constant 0 : i32
    return %arg0, %c0_i32 : i32, i32
  }
  func.func @transform_1(%arg0: i32, %arg1: i32) -> (i32, i32) {
    %c0_i32 = arith.constant 0 : i32
    %c0_i32_0 = arith.constant 0 : i32
    return %c0_i32, %arg1 : i32, i32
  }
  func.func @transform_2(%arg0: i32, %arg1: i32) -> (i32, i32) {
    %c0_i32 = arith.constant 0 : i32
    %c0_i32_0 = arith.constant 0 : i32
    return %c0_i32, %arg1 : i32, i32
  }
  func.func @transform_3(%arg0: i32, %arg1: i32) -> (i32, i32) {
    %c0_i32 = arith.constant 0 : i32
    %c0_i32_0 = arith.constant 0 : i32
    return %arg1, %c0_i32 : i32, i32
  }
  func.func @transform_4(%arg0: i32, %arg1: i32) -> (i32, i32) {
    %c0_i32 = arith.constant 0 : i32
    %c0_i32_0 = arith.constant 0 : i32
    %c0_i32_1 = arith.constant 0 : i32
    return %c0_i32, %c0_i32_0 : i32, i32
  }
  func.func @transform_5(%arg0: i32, %arg1: i32) -> (i32, i32) {
    %c0_i32 = arith.constant 0 : i32
    %c0_i32_0 = arith.constant 0 : i32
    return %arg0, %c0_i32 : i32, i32
  }
}

</mosaic_0001>

<llo_original>
// kernel: positionwise_feed_forward.1
$region0: #{positionwise_feed_forward.1}
  #allocation0 [shape = 'u32[]', space=smem, size = 0x4, offset = 0x4, fixed_abs, tag = 'smem constant byte address 0x4 - core index']
  #allocation1 [shape = 'u32[144,128]{1,0:T(1,128)}', space=vmem, size = 0x12000, scoped, tag = 'internal scratch']
  %s0 = inlined_call_operand.hbm [shape: f32[16,128], index: 0, kind: input, shape index: {}]
  %s1 = inlined_call_operand.hbm [shape: f32[128,256], index: 1, kind: input, shape index: {}]
  %s2 = inlined_call_operand.vmem [shape: f32[1,256], index: 2, kind: input, shape index: {}]
  %s3 = inlined_call_operand.hbm [shape: f32[256,128], index: 3, kind: input, shape index: {}]
  %s4 = inlined_call_operand.vmem [shape: f32[1,128], index: 4, kind: input, shape index: {}]
  %s5 = inlined_call_operand.hbm [shape: f32[16,128], index: 5, kind: output, shape index: {}]
  %s6 = sld [smem:[#allocation0]]
  $region46: #{positionwise_feed_forward.1} parent=0
    _
  %s8 = ssub.s32 1, %s6
  %s9 = scalar_select 0, %s8, %s6
  $region1: #{positionwise_feed_forward.1} parent=0
    #allocation2 [shape = 'u8[8192]{0}', space=vmem, size = 0x2000, scoped, tag = 'input window, operand 0, single buffered']
    #allocation3 [shape = 's32[1]{0}', space=sflag, size = 0x4, scoped, tag = 'scoped memory for positionwise_feed_forward.1']
    #allocation4 [shape = 's32[1]{0}', space=sflag, size = 0x4, scoped, tag = 'scoped memory for positionwise_feed_forward.1']
    #allocation5 [shape = 'u8[131072]{0}', space=vmem, size = 0x20000, scoped, tag = 'input window, operand 1, single buffered']
    #allocation6 [shape = 's32[1]{0}', space=sflag, size = 0x4, scoped, tag = 'scoped memory for positionwise_feed_forward.1']
    #allocation7 [shape = 'u8[131072]{0}', space=vmem, size = 0x20000, scoped, tag = 'input window, operand 3, single buffered']
    #allocation8 [shape = 'u8[8192]{0}', space=vmem, size = 0x2000, scoped, tag = 'output window, operand 0, single buffered']
    %10 = vsyncpa [#allocation3], 0
    %11 = vsyncpa [#allocation6], 0
    %12 = vsyncpa [#allocation4], 0
    // Predicated region
    $region2: #{positionwise_feed_forward.1} parent=1 // pred_check
      _
    $region3: #{positionwise_feed_forward.1} parent=1 // pred_check_branch
      %14 = sbr.rel (0) target = $region5
    $region4: #{positionwise_feed_forward.1} parent=1 // pred_region
      %s16 = ssub.s32 256, 256
      %17 = vsyncadd [#allocation3], %s16
      %s18 = sshll.u32 [#allocation2], 4
      %s19 = int_to_ptr.vmem [resolvable:$true] %s18
      %24 = dma.hbm_to_vmem [thread:$0]  %s0, 256, %s19, [#allocation3], 128, 128, 8
    $region5: #{positionwise_feed_forward.1} parent=1 // pred_fallthru
      _
    // Predicated region
    $region6: #{positionwise_feed_forward.1} parent=1 // pred_check
      _
    $region7: #{positionwise_feed_forward.1} parent=1 // pred_check_branch
      %26 = sbr.rel (0) target = $region9
    $region8: #{positionwise_feed_forward.1} parent=1 // pred_region
      %s28 = ssub.s32 4096, 4096
      %29 = vsyncadd [#allocation6], %s28
      %s30 = sshll.u32 [#allocation5], 4
      %s31 = int_to_ptr.vmem [resolvable:$true] %s30
      %36 = dma.hbm_to_vmem [thread:$0]  %s1, 4096, %s31, [#allocation6], 256, 256, 16
    $region9: #{positionwise_feed_forward.1} parent=1 // pred_fallthru
      _
    // Predicated region
    $region10: #{positionwise_feed_forward.1} parent=1 // pred_check
      _
    $region11: #{positionwise_feed_forward.1} parent=1 // pred_check_branch
      %38 = sbr.rel (0) target = $region13
    $region12: #{positionwise_feed_forward.1} parent=1 // pred_region
      _
    $region13: #{positionwise_feed_forward.1} parent=1 // pred_fallthru
      _
    // Predicated region
    $region14: #{positionwise_feed_forward.1} parent=1 // pred_check
      _
    $region15: #{positionwise_feed_forward.1} parent=1 // pred_check_branch
      %40 = sbr.rel (0) target = $region17
    $region16: #{positionwise_feed_forward.1} parent=1 // pred_region
      %s42 = ssub.s32 4096, 4096
      %43 = vsyncadd [#allocation6], %s42
      %s44 = sshll.u32 [#allocation7], 4
      %s45 = int_to_ptr.vmem [resolvable:$true] %s44
      %50 = dma.hbm_to_vmem [thread:$0]  %s3, 4096, %s45, [#allocation6], 128, 128, 8
    $region17: #{positionwise_feed_forward.1} parent=1 // pred_fallthru
      _
    // Predicated region
    $region18: #{positionwise_feed_forward.1} parent=1 // pred_check
      _
    $region19: #{positionwise_feed_forward.1} parent=1 // pred_check_branch
      %52 = sbr.rel (0) target = $region21
    $region20: #{positionwise_feed_forward.1} parent=1 // pred_region
      _
    $region21: #{positionwise_feed_forward.1} parent=1 // pred_fallthru
      _
    // Predicated region
    $region22: #{positionwise_feed_forward.1} parent=1 // pred_check
      _
    $region23: #{positionwise_feed_forward.1} parent=1 // pred_check_branch
      %54 = sbr.rel (0) target = $region25
    $region24: #{positionwise_feed_forward.1} parent=1 // pred_region
      %55 = dma.done [#allocation3], 256
    $region25: #{positionwise_feed_forward.1} parent=1 // pred_fallthru
      _
    // Predicated region
    $region26: #{positionwise_feed_forward.1} parent=1 // pred_check
      _
    $region27: #{positionwise_feed_forward.1} parent=1 // pred_check_branch
      %57 = sbr.rel (0) target = $region29
    $region28: #{positionwise_feed_forward.1} parent=1 // pred_region
      %58 = dma.done [#allocation6], 4096
    $region29: #{positionwise_feed_forward.1} parent=1 // pred_fallthru
      _
    // Predicated region
    $region30: #{positionwise_feed_forward.1} parent=1 // pred_check
      _
    $region31: #{positionwise_feed_forward.1} parent=1 // pred_check_branch
      %60 = sbr.rel (0) target = $region33
    $region32: #{positionwise_feed_forward.1} parent=1 // pred_region
      %61 = dma.done [#allocation6], 4096
    $region33: #{positionwise_feed_forward.1} parent=1 // pred_fallthru
      _
    %p62 = scmp.eq.s32.totalorder 0, 0
    // Predicated region
    $region34: #{positionwise_feed_forward.1} parent=1 // pred_check
      %p63 = pneg %p62
    $region35: #{positionwise_feed_forward.1} parent=1 // pred_check_branch
      %65 = sbr.rel (%p63) target = $region37
    $region36: #{positionwise_feed_forward.1} parent=1 // pred_region
      %v66 = vld [vmem:[%s4] sm:$0x1]
      %v68 = vlaneseq
      %v69 = vshrl.u32 %v68, 7
      %v70 = vsub.s32 0, %v69
      %v71 = vrot.slane %v66, %v70
      %73 = vst [vmem:[#allocation8] sm:$0xff] %v71
      %74 = vst [vmem:[#allocation8 + $0x8] sm:$0xff] %v71
    $region37: #{positionwise_feed_forward.1} parent=1 // pred_fallthru
      _
    %v75 = vld [vmem:[#allocation2] sm:$0xff]
    %v76 = vld [vmem:[#allocation2 + $0x8] sm:$0xff]
    %v77 = vld [vmem:[#allocation5] sm:$0xff]
    %v78 = vld [vmem:[#allocation5 + $0x8] sm:$0xff]
    %v79 = vld [vmem:[#allocation5 + $0x10] sm:$0xff]
    %v80 = vld [vmem:[#allocation5 + $0x18] sm:$0xff]
    %v81 = vld [vmem:[#allocation5 + $0x20] sm:$0xff]
    %v82 = vld [vmem:[#allocation5 + $0x28] sm:$0xff]
    %v83 = vld [vmem:[#allocation5 + $0x30] sm:$0xff]
    %v84 = vld [vmem:[#allocation5 + $0x38] sm:$0xff]
    %v85 = vld [vmem:[#allocation5 + $0x40] sm:$0xff]
    %v86 = vld [vmem:[#allocation5 + $0x48] sm:$0xff]
    %v87 = vld [vmem:[#allocation5 + $0x50] sm:$0xff]
    %v88 = vld [vmem:[#allocation5 + $0x58] sm:$0xff]
    %v89 = vld [vmem:[#allocation5 + $0x60] sm:$0xff]
    %v90 = vld [vmem:[#allocation5 + $0x68] sm:$0xff]
    %v91 = vld [vmem:[#allocation5 + $0x70] sm:$0xff]
    %v92 = vld [vmem:[#allocation5 + $0x78] sm:$0xff]
    %v93 = vld [vmem:[#allocation5 + $0x80] sm:$0xff]
    %v94 = vld [vmem:[#allocation5 + $0x88] sm:$0xff]
    %v95 = vld [vmem:[#allocation5 + $0x90] sm:$0xff]
    %v96 = vld [vmem:[#allocation5 + $0x98] sm:$0xff]
    %v97 = vld [vmem:[#allocation5 + $0xa0] sm:$0xff]
    %v98 = vld [vmem:[#allocation5 + $0xa8] sm:$0xff]
    %v99 = vld [vmem:[#allocation5 + $0xb0] sm:$0xff]
    %v100 = vld [vmem:[#allocation5 + $0xb8] sm:$0xff]
    %v101 = vld [vmem:[#allocation5 + $0xc0] sm:$0xff]
    %v102 = vld [vmem:[#allocation5 + $0xc8] sm:$0xff]
    %v103 = vld [vmem:[#allocation5 + $0xd0] sm:$0xff]
    %v104 = vld [vmem:[#allocation5 + $0xd8] sm:$0xff]
    %v105 = vld [vmem:[#allocation5 + $0xe0] sm:$0xff]
    %v106 = vld [vmem:[#allocation5 + $0xe8] sm:$0xff]
    %v107 = vld [vmem:[#allocation5 + $0xf0] sm:$0xff]
    %v108 = vld [vmem:[#allocation5 + $0xf8] sm:$0xff]
    %v109 = vld [vmem:[%s2] sm:$0x3]
    %v111 = vlaneseq
    %v112 = vshrl.u32 %v111, 7
    %v113 = vsub.s32 0, %v112
    %v114 = vrot.slane %v109, %v113
    %v115 = vlaneseq
    %v116 = vshrl.u32 %v115, 7
    %v117 = vsub.s32 1, %v116
    %v118 = vrot.slane %v109, %v117
    %121 = vmatprep.subr.mxu0 %v78
    %122 = vmatpush1.msra.mxu0 %v77
    %123 = vmatprep.subr.mxu0 %v80
    %124 = vmatpush1.msra.mxu0 %v79
    %125 = vmatprep.subr.mxu0 %v82
    %126 = vmatpush1.msra.mxu0 %v81
    %127 = vmatprep.subr.mxu0 %v84
    %128 = vmatpush1.msra.mxu0 %v83
    %129 = vmatprep.subr.mxu0 %v86
    %130 = vmatpush1.msra.mxu0 %v85
    %131 = vmatprep.subr.mxu0 %v88
    %132 = vmatpush1.msra.mxu0 %v87
    %133 = vmatprep.subr.mxu0 %v90
    %134 = vmatpush1.msra.mxu0 %v89
    %135 = vmatprep.subr.mxu0 %v92
    %136 = vmatpush1.msra.mxu0 %v91
    %137 = vmatprep.subr.mxu0 %v94
    %138 = vmatpush1.msra.mxu0 %v93
    %139 = vmatprep.subr.mxu0 %v96
    %140 = vmatpush1.msra.mxu0 %v95
    %141 = vmatprep.subr.mxu0 %v98
    %142 = vmatpush1.msra.mxu0 %v97
    %143 = vmatprep.subr.mxu0 %v100
    %144 = vmatpush1.msra.mxu0 %v99
    %145 = vmatprep.subr.mxu0 %v102
    %146 = vmatpush1.msra.mxu0 %v101
    %147 = vmatprep.subr.mxu0 %v104
    %148 = vmatpush1.msra.mxu0 %v103
    %149 = vmatprep.subr.mxu0 %v106
    %150 = vmatpush1.msra.mxu0 %v105
    %151 = vmatprep.subr.mxu0 %v108
    %152 = vmatpush1.msra.mxu0 %v107
    %153 = vmatprep.subr.mxu0 0.0
    %154 = vmatpush1.msra.mxu0 0.0
    %155 = vmatprep.subr.mxu0 0.0
    %156 = vmatpush1.msra.mxu0 0.0
    %157 = vmatprep.subr.mxu0 0.0
    %158 = vmatpush1.msra.mxu0 0.0
    %159 = vmatprep.subr.mxu0 0.0
    %160 = vmatpush1.msra.mxu0 0.0
    %161 = vmatprep.subr.mxu0 0.0
    %162 = vmatpush1.msra.mxu0 0.0
    %163 = vmatprep.subr.mxu0 0.0
    %164 = vmatpush1.msra.mxu0 0.0
    %165 = vmatprep.subr.mxu0 0.0
    %166 = vmatpush1.msra.mxu0 0.0
    %167 = vmatprep.subr.mxu0 0.0
    %168 = vmatpush1.msra.mxu0 0.0
    %169 = vmatprep.subr.mxu0 0.0
    %170 = vmatpush1.msra.mxu0 0.0
    %171 = vmatprep.subr.mxu0 0.0
    %172 = vmatpush1.msra.mxu0 0.0
    %173 = vmatprep.subr.mxu0 0.0
    %174 = vmatpush1.msra.mxu0 0.0
    %175 = vmatprep.subr.mxu0 0.0
    %176 = vmatpush1.msra.mxu0 0.0
    %177 = vmatprep.subr.mxu0 0.0
    %178 = vmatpush1.msra.mxu0 0.0
    %179 = vmatprep.subr.mxu0 0.0
    %180 = vmatpush1.msra.mxu0 0.0
    %181 = vmatprep.subr.mxu0 0.0
    %182 = vmatpush1.msra.mxu0 0.0
    %183 = vmatprep.subr.mxu0 0.0
    %184 = vmatpush1.msra.mxu0 0.0
    %185 = vmatprep.mubr.f32.mxu0 0.0
    %186 = vmatmul.mubr.f32.gmra.mrb[0].mxu0 %v75
    %v187 = vpop.f32.mrb[0].mxu0
    %v188 = vadd.f32 %v114, %v187
    %v189 = vpop.f32.mrb[0].mxu0
    %v190 = vadd.f32 %v118, %v189
    %191 = vmatprep.mubr.f32.mxu0 0.0
    %192 = vmatmul.mubr.f32.gmra.mrb[0].mxu0 %v76
    %v193 = vpop.f32.mrb[0].mxu0
    %v194 = vadd.f32 %v114, %v193
    %v195 = vpop.f32.mrb[0].mxu0
    %v196 = vadd.f32 %v118, %v195
    %197 = vdwg.mxu0
    %v198 = vmax.f32 %v188, 0.0
    %v199 = vmax.f32 %v190, 0.0
    %v200 = vmax.f32 %v194, 0.0
    %v201 = vmax.f32 %v196, 0.0
    %v202 = vld [vmem:[#allocation8] sm:$0xff]
    %v203 = vld [vmem:[#allocation8 + $0x8] sm:$0xff]
    %v204 = vld [vmem:[#allocation7] sm:$0xff]
    %v205 = vld [vmem:[#allocation7 + $0x8] sm:$0xff]
    %v206 = vld [vmem:[#allocation7 + $0x10] sm:$0xff]
    %v207 = vld [vmem:[#allocation7 + $0x18] sm:$0xff]
    %v208 = vld [vmem:[#allocation7 + $0x20] sm:$0xff]
    %v209 = vld [vmem:[#allocation7 + $0x28] sm:$0xff]
    %v210 = vld [vmem:[#allocation7 + $0x30] sm:$0xff]
    %v211 = vld [vmem:[#allocation7 + $0x38] sm:$0xff]
    %v212 = vld [vmem:[#allocation7 + $0x40] sm:$0xff]
    %v213 = vld [vmem:[#allocation7 + $0x48] sm:$0xff]
    %v214 = vld [vmem:[#allocation7 + $0x50] sm:$0xff]
    %v215 = vld [vmem:[#allocation7 + $0x58] sm:$0xff]
    %v216 = vld [vmem:[#allocation7 + $0x60] sm:$0xff]
    %v217 = vld [vmem:[#allocation7 + $0x68] sm:$0xff]
    %v218 = vld [vmem:[#allocation7 + $0x70] sm:$0xff]
    %v219 = vld [vmem:[#allocation7 + $0x78] sm:$0xff]
    %v220 = vld [vmem:[#allocation7 + $0x80] sm:$0xff]
    %v221 = vld [vmem:[#allocation7 + $0x88] sm:$0xff]
    %v222 = vld [vmem:[#allocation7 + $0x90] sm:$0xff]
    %v223 = vld [vmem:[#allocation7 + $0x98] sm:$0xff]
    %v224 = vld [vmem:[#allocation7 + $0xa0] sm:$0xff]
    %v225 = vld [vmem:[#allocation7 + $0xa8] sm:$0xff]
    %v226 = vld [vmem:[#allocation7 + $0xb0] sm:$0xff]
    %v227 = vld [vmem:[#allocation7 + $0xb8] sm:$0xff]
    %v228 = vld [vmem:[#allocation7 + $0xc0] sm:$0xff]
    %v229 = vld [vmem:[#allocation7 + $0xc8] sm:$0xff]
    %v230 = vld [vmem:[#allocation7 + $0xd0] sm:$0xff]
    %v231 = vld [vmem:[#allocation7 + $0xd8] sm:$0xff]
    %v232 = vld [vmem:[#allocation7 + $0xe0] sm:$0xff]
    %v233 = vld [vmem:[#allocation7 + $0xe8] sm:$0xff]
    %v234 = vld [vmem:[#allocation7 + $0xf0] sm:$0xff]
    %v235 = vld [vmem:[#allocation7 + $0xf8] sm:$0xff]
    %236 = vmatprep.subr.mxu0 0.0
    %237 = vmatpush1.msra.mxu0 %v204
    %238 = vmatprep.subr.mxu0 0.0
    %239 = vmatpush1.msra.mxu0 %v205
    %240 = vmatprep.subr.mxu0 0.0
    %241 = vmatpush1.msra.mxu0 %v206
    %242 = vmatprep.subr.mxu0 0.0
    %243 = vmatpush1.msra.mxu0 %v207
    %244 = vmatprep.subr.mxu0 0.0
    %245 = vmatpush1.msra.mxu0 %v208
    %246 = vmatprep.subr.mxu0 0.0
    %247 = vmatpush1.msra.mxu0 %v209
    %248 = vmatprep.subr.mxu0 0.0
    %249 = vmatpush1.msra.mxu0 %v210
    %250 = vmatprep.subr.mxu0 0.0
    %251 = vmatpush1.msra.mxu0 %v211
    %252 = vmatprep.subr.mxu0 0.0
    %253 = vmatpush1.msra.mxu0 %v212
    %254 = vmatprep.subr.mxu0 0.0
    %255 = vmatpush1.msra.mxu0 %v213
    %256 = vmatprep.subr.mxu0 0.0
    %257 = vmatpush1.msra.mxu0 %v214
    %258 = vmatprep.subr.mxu0 0.0
    %259 = vmatpush1.msra.mxu0 %v215
    %260 = vmatprep.subr.mxu0 0.0
    %261 = vmatpush1.msra.mxu0 %v216
    %262 = vmatprep.subr.mxu0 0.0
    %263 = vmatpush1.msra.mxu0 %v217
    %264 = vmatprep.subr.mxu0 0.0
    %265 = vmatpush1.msra.mxu0 %v218
    %266 = vmatprep.subr.mxu0 0.0
    %267 = vmatpush1.msra.mxu0 %v219
    %268 = vmatprep.subr.mxu0 0.0
    %269 = vmatpush1.msra.mxu0 %v220
    %270 = vmatprep.subr.mxu0 0.0
    %271 = vmatpush1.msra.mxu0 %v221
    %272 = vmatprep.subr.mxu0 0.0
    %273 = vmatpush1.msra.mxu0 %v222
    %274 = vmatprep.subr.mxu0 0.0
    %275 = vmatpush1.msra.mxu0 %v223
    %276 = vmatprep.subr.mxu0 0.0
    %277 = vmatpush1.msra.mxu0 %v224
    %278 = vmatprep.subr.mxu0 0.0
    %279 = vmatpush1.msra.mxu0 %v225
    %280 = vmatprep.subr.mxu0 0.0
    %281 = vmatpush1.msra.mxu0 %v226
    %282 = vmatprep.subr.mxu0 0.0
    %283 = vmatpush1.msra.mxu0 %v227
    %284 = vmatprep.subr.mxu0 0.0
    %285 = vmatpush1.msra.mxu0 %v228
    %286 = vmatprep.subr.mxu0 0.0
    %287 = vmatpush1.msra.mxu0 %v229
    %288 = vmatprep.subr.mxu0 0.0
    %289 = vmatpush1.msra.mxu0 %v230
    %290 = vmatprep.subr.mxu0 0.0
    %291 = vmatpush1.msra.mxu0 %v231
    %292 = vmatprep.subr.mxu0 0.0
    %293 = vmatpush1.msra.mxu0 %v232
    %294 = vmatprep.subr.mxu0 0.0
    %295 = vmatpush1.msra.mxu0 %v233
    %296 = vmatprep.subr.mxu0 0.0
    %297 = vmatpush1.msra.mxu0 %v234
    %298 = vmatprep.subr.mxu0 0.0
    %299 = vmatpush1.msra.mxu0 %v235
    %300 = vmatprep.mubr.f32.mxu0 %v199
    %301 = vmatmul.mubr.f32.gmra.mrb[0].mxu0 %v198
    %v302 = vpop.f32.mrb[0].mxu0
    %v303 = vadd.f32 0.0, %v302
    %v304 = vpop.f32.mrb[0].mxu0
    %305 = vmatprep.mubr.f32.mxu0 %v201
    %306 = vmatmul.mubr.f32.gmra.mrb[0].mxu0 %v200
    %v307 = vpop.f32.mrb[0].mxu0
    %v308 = vadd.f32 0.0, %v307
    %v309 = vpop.f32.mrb[0].mxu0
    %310 = vdwg.mxu0
    %v311 = vadd.f32 %v202, %v303
    %v312 = vadd.f32 %v203, %v308
    %313 = vst [vmem:[#allocation8] sm:$0xff] %v311
    %314 = vst [vmem:[#allocation8 + $0x8] sm:$0xff] %v312
    // Predicated region
    $region38: #{positionwise_feed_forward.1} parent=1 // pred_check
      _
    $region39: #{positionwise_feed_forward.1} parent=1 // pred_check_branch
      %316 = sbr.rel (0) target = $region41
    $region40: #{positionwise_feed_forward.1} parent=1 // pred_region
      %s318 = ssub.s32 256, 256
      %319 = vsyncadd [#allocation4], %s318
      %s320 = sshll.u32 [#allocation8], 4
      %s321 = int_to_ptr.vmem [resolvable:$true] %s320
      %326 = dma.vmem_to_hbm [thread:$0]  %s321, 256, %s5, [#allocation4], 128, 128, 8
    $region41: #{positionwise_feed_forward.1} parent=1 // pred_fallthru
      _
    // Predicated region
    $region42: #{positionwise_feed_forward.1} parent=1 // pred_check
      _
    $region43: #{positionwise_feed_forward.1} parent=1 // pred_check_branch
      %328 = sbr.rel (0) target = $region45
    $region44: #{positionwise_feed_forward.1} parent=1 // pred_region
      %329 = dma.done [#allocation4], 256
    $region45: #{positionwise_feed_forward.1} parent=1 // pred_fallthru
      _
    %330 = vsyncpa [#allocation3], 1
    %331 = vsyncpa [#allocation6], 1
    %332 = vsyncpa [#allocation4], 1

</llo_original>
